<compile_context>
chip_gen: v7x
topology: tpu7x:2x2x1
jax: 0.10.0
libtpu: 0.0.40
codegen_flags: <defaults>
</compile_context>

<pallas_src>
import functools

import jax
import jax.numpy as jnp
from jax import lax
from jax.experimental import pallas as pl
from jax.experimental.pallas import tpu as pltpu

# channels zeroed in the history (matches 0:3+3 and 3+3+3:3+3+3+3 in the spec)
_Z0_LO, _Z0_HI = 0, 6
_Z1_LO, _Z1_HI = 9, 12


def _zero_reset_channels(obs):
    """Zero channels [_Z0_LO,_Z0_HI) and [_Z1_LO,_Z1_HI) of a (TB, D) tile."""
    lane = lax.broadcasted_iota(jnp.int32, obs.shape, 1)
    zeroed = (((lane >= _Z0_LO) & (lane < _Z0_HI)) |
              ((lane >= _Z1_LO) & (lane < _Z1_HI)))
    return jnp.where(zeroed, jnp.zeros((), obs.dtype), obs)


# ----------------------------------------------------------------------------
# pltpu.roll convention probe (one tiny kernel, cached per process)
# ----------------------------------------------------------------------------
@functools.lru_cache(maxsize=None)
def _roll_matches_numpy():
    """True iff pltpu.roll(x, s, axis) == jnp.roll(x, s, axis) for s > 0."""
    def k(x_ref, o_ref):
        o_ref[...] = pltpu.roll(x_ref[...], shift=1, axis=1)
    x = jnp.broadcast_to(jnp.arange(128, dtype=jnp.float32)[None, :], (8, 128))
    y = pl.pallas_call(
        k, out_shape=jax.ShapeDtypeStruct((8, 128), jnp.float32))(x)
    return bool(jax.device_get(y[0, 1]) == 0.0)   # jnp.roll: y[0,1] == x[0,0]


def _left_roll_shift(width, d):
    """Static shift so the in-kernel roll moves lanes d positions LEFT
    (i.e. equals jnp.roll(x, -d, axis=-1)), whatever pltpu.roll's convention."""
    if width == d:
        return 0
    return (width - d) if _roll_matches_numpy() else d


# ----------------------------------------------------------------------------
# Kernels
# ----------------------------------------------------------------------------
def _init_kernel(obs_ref, buf_ref, mask_ref):
    T, TB = mask_ref.shape
    obs = obs_ref[...]                                  # (TB, D)
    masked_obs = _zero_reset_channels(obs)              # small (TB, D) selects
    # timesteps 0..T-2 hold the channel-zeroed obs, timestep T-1 the raw obs
    buf_ref[...] = jnp.concatenate([masked_obs] * (T - 1) + [obs], axis=-1)
    row = lax.broadcasted_iota(jnp.int32, (T, TB), 0)
    mask_ref[...] = (row != T - 1).astype(jnp.int32)    # (T, TB)


def _update_kernel(dones_col_ref, dones_row_ref, obs_ref, buf_ref, mask_ref,
                   new_buf_ref, new_mask_ref, *, left_shift):
    T, TB = mask_ref.shape
    D = obs_ref.shape[1]
    TD = buf_ref.shape[1]

    obs = obs_ref[...]                                  # (TB, D)
    masked_obs = _zero_reset_channels(obs)              # (TB, D)
    reset_col = dones_col_ref[...] != 0                 # (TB, 1)

    # time-shift: rotate the flat history left by one timestep (D lanes) on
    # the XLU (no materialized lane concat of the big tile).
    old = buf_ref[...]                                  # (TB, T*D)
    rolled = old if left_shift == 0 else pltpu.roll(old, shift=left_shift, axis=1)

    # refill value: channel-zeroed obs on timesteps 0..T-2, raw obs at T-1.
    fill = jnp.concatenate([masked_obs] * (T - 1) + [obs], axis=-1)  # (TB, T*D)

    # take `fill` on done rows everywhere, and on the last D lanes (the newly
    # appended obs -- fill's tail is the raw obs) for every row; one
    # full-width, unmasked store of the new buffer tile.
    lane = lax.broadcasted_iota(jnp.int32, (1, TD), 1)
    tail = lane >= (TD - D)                             # (1, T*D)
    new_buf_ref[...] = jnp.where(reset_col | tail, fill, rolled)

    # mask update in (T, TB) layout (batch on lanes); single full-tile store.
    reset_row = dones_row_ref[...] != 0                 # (1, TB)
    upd = jnp.where(reset_row, jnp.ones_like(mask_ref[...]), mask_ref[...])
    new_mask_ref[...] = jnp.concatenate(
        [upd[1:, :], jnp.zeros((1, TB), upd.dtype)], axis=0)


# ----------------------------------------------------------------------------
# pallas_call wrappers
# ----------------------------------------------------------------------------
def _batch_tile(B, TD, itemsize):
    """Rows per batch block."""
    if B <= 128:
        return B                      # single block; block == full array dims
    # >= ~8 grid steps (>= 3-4 per TensorCore on dual-core chips) so the DMA
    # pipeline has work to overlap with and the megacore split stays balanced;
    # TB must be a multiple of 128 (the transposed mask puts batch on lanes).
    tb = max(128, (B // (8 * 128)) * 128)
    # cap the flat (TB, TD) buffer block at ~1 MiB (double-buffered in+out
    # stays far below the 16/32 MiB scoped-VMEM defaults on v5e/v6e/v7x).
    cap = max(128, ((1 << 20) // max(TD * itemsize, 1)) // 128 * 128)
    return min(tb, cap)


@functools.partial(jax.jit, static_argnums=(1,))
def init_history(obs, history_len):
    B, D = obs.shape
    T = int(history_len)
    TD = T * D
    itemsize = jnp.dtype(obs.dtype).itemsize
    TB = _batch_tile(B, TD, itemsize)
    nb = pl.cdiv(B, TB)
    return pl.pallas_call(
        _init_kernel,
        out_shape=(jax.ShapeDtypeStruct((B, TD), obs.dtype),   # flat buffer
                   jax.ShapeDtypeStruct((T, B), jnp.int32)),   # transposed mask
        grid=(nb,),
        in_specs=[pl.BlockSpec((TB, D), lambda i: (i, 0))],
        out_specs=(pl.BlockSpec((TB, TD), lambda i: (i, 0)),
                   pl.BlockSpec((T, TB), lambda i: (0, i))),
        compiler_params=pltpu.CompilerParams(
            dimension_semantics=("parallel",)),
        cost_estimate=pl.CostEstimate(
            flops=0, transcendentals=0,
            bytes_accessed=int(B * D * itemsize + B * TD * itemsize + T * B * 4)),
    )(obs)


def update_history(dones_col, dones_row, obs, old_buf, old_mask):
    left_shift = _left_roll_shift(old_buf.shape[1], obs.shape[1])
    return _update_history_jit(dones_col, dones_row, obs, old_buf, old_mask,
                               left_shift)


@functools.partial(jax.jit, static_argnums=(5,), donate_argnums=(3, 4))
def _update_history_jit(dones_col, dones_row, obs, old_buf, old_mask, left_shift):
    B, D = obs.shape
    T = old_mask.shape[0]
    TD = old_buf.shape[1]
    itemsize = jnp.dtype(obs.dtype).itemsize
    TB = _batch_tile(B, TD, itemsize)
    nb = pl.cdiv(B, TB)
    kernel = functools.partial(_update_kernel, left_shift=left_shift)
    return pl.pallas_call(
        kernel,
        out_shape=(jax.ShapeDtypeStruct((B, TD), obs.dtype),
                   jax.ShapeDtypeStruct((T, B), jnp.int32)),
        grid=(nb,),
        in_specs=[pl.BlockSpec((TB, 1), lambda i: (i, 0)),    # dones (col)
                  pl.BlockSpec((1, TB), lambda i: (0, i)),    # dones (row)
                  pl.BlockSpec((TB, D), lambda i: (i, 0)),    # obs
                  pl.BlockSpec((TB, TD), lambda i: (i, 0)),   # old flat buffer
                  pl.BlockSpec((T, TB), lambda i: (0, i))],   # old mask (T, B)
        out_specs=(pl.BlockSpec((TB, TD), lambda i: (i, 0)),
                   pl.BlockSpec((T, TB), lambda i: (0, i))),
        input_output_aliases={3: 0, 4: 1},                    # update in place
        compiler_params=pltpu.CompilerParams(
            dimension_semantics=("parallel",)),
        cost_estimate=pl.CostEstimate(
            flops=0, transcendentals=0,
            bytes_accessed=int(2 * B * TD * itemsize + B * D * itemsize
                               + 2 * T * B * 4 + 2 * B * 4)),
    )(dones_col, dones_row, obs, old_buf, old_mask)


class HistoryBuffer:
    """Functional JAX/Pallas port of the PyTorch HistoryBuffer forward pass."""

    def __init__(self, history_buffer_length: int):
        self.history_buffer_length = history_buffer_length
        self._buf_flat = None        # (B, T*D) float
        self._mask_tb = None         # (T, B) int32 (bool semantics)
        self._obs_dim = None

    def forward(self, obs, dones=None, sampling_interval: int = 1):
        B, D = obs.shape
        if D < _Z1_HI:
            raise ValueError(
                f"obs dim {D} must be >= {_Z1_HI} (zeroed channel ranges)")
        T = self.history_buffer_length
        need_init = (self._buf_flat is None
                     or self._buf_flat.shape[0] != B
                     or self._obs_dim != D
                     or self._mask_tb.shape[0] != T)
        if need_init:
            buf_flat, mask_tb = init_history(obs, T)
        else:
            if dones is None:
                d = jnp.zeros((B,), jnp.int32)
            else:
                d = dones.astype(jnp.int32).reshape(B)
            buf_flat, mask_tb = update_history(
                d.reshape(B, 1), d.reshape(1, B), obs,
                self._buf_flat, self._mask_tb)

        self._buf_flat = buf_flat
        self._mask_tb = mask_tb
        self._obs_dim = D

        # user-facing views (layout plumbing only)
        buf = buf_flat.reshape(B, T, D)
        mask = mask_tb.T.astype(jnp.bool_)

        if sampling_interval == 1:
            return buf, mask
        elif sampling_interval > 1:
            return (buf[:, ::sampling_interval, :],
                    mask[:, ::sampling_interval])
        else:
            raise ValueError(f"Unsupported sampling interval: {sampling_interval}")

    __call__ = forward


# ----------------------------------------------------------------------------
# Pure-JAX reference (mirrors the PyTorch code) for correctness checking
# ----------------------------------------------------------------------------
def _ref_init(obs, T):
    B, D = obs.shape
    buf = jnp.broadcast_to(obs[:, None, :], (B, T, D))
    buf = buf.at[:, :-1, _Z0_LO:_Z0_HI].set(0.0)
    buf = buf.at[:, :-1, _Z1_LO:_Z1_HI].set(0.0)
    mask = jnp.ones((B, T), jnp.bool_).at[:, -1].set(False)
    return buf, mask


def _ref_update(dones, obs, buf, mask):
    B, T, D = buf.shape
    reset = dones.astype(jnp.bool_)
    fill = jnp.broadcast_to(obs[:, None, :], (B, T, D))
    fill = fill.at[:, :, _Z0_LO:_Z0_HI].set(0.0)
    fill = fill.at[:, :, _Z1_LO:_Z1_HI].set(0.0)
    temp = jnp.where(reset[:, None, None], fill, buf)
    temp_mask = jnp.where(reset[:, None], True, mask)
    new_buf = jnp.concatenate([temp[:, 1:, :], obs[:, None, :]], axis=1)
    new_mask = jnp.concatenate(
        [temp_mask[:, 1:], jnp.zeros((B, 1), jnp.bool_)], axis=1)
    return new_buf, new_mask


def _run_checks(B, T, D):
    key = jax.random.PRNGKey(0)
    hb = HistoryBuffer(history_buffer_length=T)

    # step 0: initialization path
    key, k0 = jax.random.split(key)
    obs0 = jax.random.normal(k0, (B, D), jnp.float32)
    buf0, mask0 = hb(obs0)
    rbuf, rmask = _ref_init(obs0, T)
    assert jnp.allclose(buf0, rbuf) and jnp.array_equal(mask0, rmask)

    # step 1: update path with a mix of done / not-done rows
    key, k1 = jax.random.split(key)
    obs1 = jax.random.normal(k1, (B, D), jnp.float32)
    dones1 = (jnp.arange(B) % 3 == 0).astype(jnp.int32)
    buf1, mask1 = hb(obs1, dones1)
    rbuf, rmask = _ref_update(dones1, obs1, rbuf, rmask)
    assert jnp.allclose(buf1, rbuf) and jnp.array_equal(mask1, rmask)

    # step 2: update path, no dones, sampling_interval=2
    key, k2 = jax.random.split(key)
    obs2 = jax.random.normal(k2, (B, D), jnp.float32)
    buf2, mask2 = hb(obs2, None, sampling_interval=2)
    rbuf, rmask = _ref_update(jnp.zeros((B,), jnp.int32), obs2, rbuf, rmask)
    assert jnp.allclose(buf2, rbuf[:, ::2, :])
    assert jnp.array_equal(mask2, rmask[:, ::2])
    jax.block_until_ready((buf2, mask2))


if __name__ == "__main__":
    # small single-block config (module-like shapes)
    _run_checks(B=8, T=8, D=32)
    # larger config: 5 batch blocks of 128 rows -> software pipelining,
    # balanced megacore split, in-place aliasing across blocks
    _run_checks(B=640, T=8, D=32)
    print("KERNEL_OK")
</pallas_src>

<mosaic_0001>
module attributes {stable_mosaic.version = 11 : i64} {
  func.func @_init_kernel(%arg0: i32, %arg1: memref<8x32xf32, #tpu.memory_space<vmem>>, %arg2: memref<8x256xf32, #tpu.memory_space<vmem>>, %arg3: memref<8x8xi32, #tpu.memory_space<vmem>>) attributes {dimension_semantics = [#tpu.dimension_semantics<parallel>], iteration_bounds = array<i64: 1>, scalar_prefetch = 0 : i64, scratch_operands = 0 : i64, tpu.core_type = #tpu.core_type<tc>, window_params = [{transform_indices = @transform_0, window_bounds = array<i64: 8, 32>}, {transform_indices = @transform_1, window_bounds = array<i64: 8, 256>}, {transform_indices = @transform_2, window_bounds = array<i64: 8, 8>}]} {
    %c0 = arith.constant 0 : index
    %c0_0 = arith.constant 0 : index
    %0 = vector.load %arg1[%c0, %c0_0] : memref<8x32xf32, #tpu.memory_space<vmem>>, vector<8x32xf32>
    %1 = tpu.iota {dimensions = array<i32: 1>} : vector<8x32xi32>
    %c0_i32 = arith.constant 0 : i32
    %2 = vector.broadcast %c0_i32 : i32 to vector<8x32xi32>
    %3 = arith.cmpi sge, %1, %2 : vector<8x32xi32>
    %c6_i32 = arith.constant 6 : i32
    %4 = vector.broadcast %c6_i32 : i32 to vector<8x32xi32>
    %5 = arith.cmpi slt, %1, %4 : vector<8x32xi32>
    %6 = arith.andi %3, %5 : vector<8x32xi1>
    %c9_i32 = arith.constant 9 : i32
    %7 = vector.broadcast %c9_i32 : i32 to vector<8x32xi32>
    %8 = arith.cmpi sge, %1, %7 : vector<8x32xi32>
    %c12_i32 = arith.constant 12 : i32
    %9 = vector.broadcast %c12_i32 : i32 to vector<8x32xi32>
    %10 = arith.cmpi slt, %1, %9 : vector<8x32xi32>
    %11 = arith.andi %8, %10 : vector<8x32xi1>
    %12 = arith.ori %6, %11 : vector<8x32xi1>
    %cst = arith.constant 0.000000e+00 : f32
    %13 = vector.broadcast %cst : f32 to vector<8x32xf32>
    %14 = arith.select %12, %13, %0 : vector<8x32xi1>, vector<8x32xf32>
    %15 = tpu.concatenate %14, %14, %14, %14, %14, %14, %14, %0 in 1 : vector<8x32xf32>, vector<8x32xf32>, vector<8x32xf32>, vector<8x32xf32>, vector<8x32xf32>, vector<8x32xf32>, vector<8x32xf32>, vector<8x32xf32> -> vector<8x256xf32>
    %c0_1 = arith.constant 0 : index
    %c0_2 = arith.constant 0 : index
    %16 = vector.load %arg2[%c0_1, %c0_2] : memref<8x256xf32, #tpu.memory_space<vmem>>, vector<8x256xf32>
    tpu.vector_store %arg2[%c0_1, %c0_2], %15 {strides = array<i32>} : memref<8x256xf32, #tpu.memory_space<vmem>>, vector<8x256xf32>,
    %17 = tpu.iota {dimensions = array<i32: 0>} : vector<8x8xi32>
    %c7_i32 = arith.constant 7 : i32
    %18 = vector.broadcast %c7_i32 : i32 to vector<8x8xi32>
    %19 = arith.cmpi ne, %17, %18 : vector<8x8xi32>
    %20 = arith.extui %19 : vector<8x8xi1> to vector<8x8xi32>
    %c0_3 = arith.constant 0 : index
    %c0_4 = arith.constant 0 : index
    %21 = vector.load %arg3[%c0_3, %c0_4] : memref<8x8xi32, #tpu.memory_space<vmem>>, vector<8x8xi32>
    tpu.vector_store %arg3[%c0_3, %c0_4], %20 {strides = array<i32>} : memref<8x8xi32, #tpu.memory_space<vmem>>, vector<8x8xi32>,
    return
  }
  func.func @transform_0(%arg0: i32) -> (i32, i32) {
    %c0_i32 = arith.constant 0 : i32
    %c0_i32_0 = arith.constant 0 : i32
    return %arg0, %c0_i32 : i32, i32
  }
  func.func @transform_1(%arg0: i32) -> (i32, i32) {
    %c0_i32 = arith.constant 0 : i32
    %c0_i32_0 = arith.constant 0 : i32
    return %arg0, %c0_i32 : i32, i32
  }
  func.func @transform_2(%arg0: i32) -> (i32, i32) {
    %c0_i32 = arith.constant 0 : i32
    %c0_i32_0 = arith.constant 0 : i32
    return %c0_i32, %arg0 : i32, i32
  }
}

</mosaic_0001>

<llo_original>
// kernel: init_history.1
$region0: #{init_history.1}
  #allocation0 [shape = 'u32[]', space=smem, size = 0x4, offset = 0x4, fixed_abs, tag = 'smem constant byte address 0x4 - core index']
  #allocation1 [shape = 'u32[144,128]{1,0:T(1,128)}', space=vmem, size = 0x12000, scoped, tag = 'internal scratch']
  %s0 = inlined_call_operand.hbm [shape: f32[8,32], index: 0, kind: input, shape index: {}]
  %s1 = inlined_call_operand.hbm [shape: f32[8,256], index: 1, kind: output, shape index: {0}]
  %s2 = inlined_call_operand.hbm [shape: s32[8,8], index: 2, kind: output, shape index: {1}]
  %3 = xla_tuple %s1, %s2
  %s4 = sld [smem:[#allocation0]]
  $region26: #{init_history.1} parent=0
    _
  %s6 = ssub.s32 1, %s4
  %s7 = scalar_select 0, %s6, %s4
  $region1: #{init_history.1} parent=0
    #allocation2 [shape = 'u8[4096]{0}', space=vmem, size = 0x1000, scoped, tag = 'input window, operand 0, single buffered']
    #allocation3 [shape = 's32[1]{0}', space=sflag, size = 0x4, scoped, tag = 'scoped memory for init_history.1']
    #allocation4 [shape = 's32[1]{0}', space=sflag, size = 0x4, scoped, tag = 'scoped memory for init_history.1']
    #allocation5 [shape = 'u8[8192]{0}', space=vmem, size = 0x2000, scoped, tag = 'output window, operand 0, single buffered']
    #allocation6 [shape = 'u8[4096]{0}', space=vmem, size = 0x1000, scoped, tag = 'output window, operand 1, single buffered']
    #allocation7 [shape = 's32[1]{0}', space=sflag, size = 0x4, scoped, tag = 'scoped memory for init_history.1']
    %8 = vsyncpa [#allocation3], 0
    %9 = vsyncpa [#allocation4], 0
    %10 = vsyncpa [#allocation7], 0
    // Predicated region
    $region2: #{init_history.1} parent=1 // pred_check
      _
    $region3: #{init_history.1} parent=1 // pred_check_branch
      %12 = sbr.rel (0) target = $region5
    $region4: #{init_history.1} parent=1 // pred_region
      %s14 = ssub.s32 128, 128
      %15 = vsyncadd [#allocation3], %s14
      %s17 = sshll.u32 [#allocation2], 4
      %s18 = int_to_ptr.vmem [resolvable:$true] %s17
      %20 = dma.hbm_to_vmem [thread:$0]  %s0, 128, %s18, [#allocation3]
    $region5: #{init_history.1} parent=1 // pred_fallthru
      _
    // Predicated region
    $region6: #{init_history.1} parent=1 // pred_check
      _
    $region7: #{init_history.1} parent=1 // pred_check_branch
      %22 = sbr.rel (0) target = $region9
    $region8: #{init_history.1} parent=1 // pred_region
      %23 = dma.done [#allocation3], 128
    $region9: #{init_history.1} parent=1 // pred_fallthru
      _
    %v24 = vld [vmem:[#allocation2] sm:$0xff]
    %v25 = vlaneseq
    %v26 = vand.u32 %v25, 127
    %vm27 = vcmp.ge.s32.totalorder %v26, 0
    %vm28 = vcmp.lt.s32.totalorder %v26, 6
    %vm29 = vmand %vm27, %vm28
    %vm30 = vcmp.ge.s32.totalorder %v26, 9
    %vm31 = vcmp.lt.s32.totalorder %v26, 12
    %vm32 = vmand %vm30, %vm31
    %vm33 = vmor %vm29, %vm32
    %v34 = vsel %vm33, 0.0, %v24
    %36 = vrot.lane.b32.xlu0 %v34, 32
    %v37 = vpop.permute.xlu0 %36
    %39 = vrot.lane.b32.xlu0 %v34, 64
    %v40 = vpop.permute.xlu0 %39
    %42 = vrot.lane.b32.xlu0 %v34, 96
    %v43 = vpop.permute.xlu0 %42
    %46 = vrot.lane.b32.xlu0 %v24, 96
    %v47 = vpop.permute.xlu0 %46
    %vm49 = vcmask 261120
    %v50 = vsel %vm49, %v34, %v37
    %vm51 = vcmask 523264
    %v52 = vsel %vm51, %v50, %v40
    %vm53 = vcmask 785408
    %v54 = vsel %vm53, %v52, %v43
    %v55 = vsel %vm53, %v52, %v47
    %56 = vst [vmem:[#allocation5] sm:$0xff] %v54
    %57 = vst [vmem:[#allocation5 + $0x8] sm:$0xff] %v55
    %v58 = vlaneseq
    %v59 = vshrl.u32 %v58, 7
    %vm60 = vcmp.ne.s32.totalorder %v59, 7
    %v61 = vsel %vm60, 1, 0
    %vm62 = vcmask 64512
    %63 = vst.msk [vmem:[#allocation6] sm:$0xff] %vm62, %v61
    // Predicated region
    $region10: #{init_history.1} parent=1 // pred_check
      _
    $region11: #{init_history.1} parent=1 // pred_check_branch
      %65 = sbr.rel (0) target = $region13
    $region12: #{init_history.1} parent=1 // pred_region
      %s67 = ssub.s32 256, 256
      %68 = vsyncadd [#allocation4], %s67
      %s70 = sshll.u32 [#allocation5], 4
      %s71 = int_to_ptr.vmem [resolvable:$true] %s70
      %73 = dma.vmem_to_hbm [thread:$0]  %s71, 256, %s1, [#allocation4]
    $region13: #{init_history.1} parent=1 // pred_fallthru
      _
    // Predicated region
    $region14: #{init_history.1} parent=1 // pred_check
      _
    $region15: #{init_history.1} parent=1 // pred_check_branch
      %75 = sbr.rel (0) target = $region17
    $region16: #{init_history.1} parent=1 // pred_region
      %s77 = ssub.s32 128, 128
      %78 = vsyncadd [#allocation7], %s77
      %s80 = sshll.u32 [#allocation6], 4
      %s81 = int_to_ptr.vmem [resolvable:$true] %s80
      %83 = dma.vmem_to_hbm [thread:$0]  %s81, 128, %s2, [#allocation7]
    $region17: #{init_history.1} parent=1 // pred_fallthru
      _
    // Predicated region
    $region18: #{init_history.1} parent=1 // pred_check
      _
    $region19: #{init_history.1} parent=1 // pred_check_branch
      %85 = sbr.rel (0) target = $region21
    $region20: #{init_history.1} parent=1 // pred_region
      %86 = dma.done [#allocation4], 256
    $region21: #{init_history.1} parent=1 // pred_fallthru
      _
    // Predicated region
    $region22: #{init_history.1} parent=1 // pred_check
      _
    $region23: #{init_history.1} parent=1 // pred_check_branch
      %88 = sbr.rel (0) target = $region25
    $region24: #{init_history.1} parent=1 // pred_region
      %89 = dma.done [#allocation7], 128
    $region25: #{init_history.1} parent=1 // pred_fallthru
      _
    %90 = vsyncpa [#allocation3], 1
    %91 = vsyncpa [#allocation4], 1
    %92 = vsyncpa [#allocation7], 1

</llo_original>
